<compile_context>
chip_gen: v5e
topology: v5e:2x2
jax: 0.10.0
libtpu: 0.0.40
codegen_flags: <defaults>
</compile_context>

<pallas_src>
import functools
import math

import numpy as np
import jax
import jax.numpy as jnp
from jax import lax
from jax.experimental import pallas as pl
from jax.experimental.pallas import tpu as pltpu


def _pick_block_rows(hout, w_lane, target_lanes=1024):
    """Output rows per spatial block.

    TH must divide Hout and TH*W must be a multiple of 128 so (a) the output
    block is a legal non-full minor block and (b) stores are unmasked,
    lane-dense vst.  Prefer >=2 blocks per image (the spatial grid axis is
    "parallel", so it feeds both v7x TensorCores even at batch 1) and a lane
    tile near `target_lanes` (512-2048 sweet spot; bounds VMEM per block).
    """
    cands = [th for th in range(1, hout + 1)
             if hout % th == 0 and (th * w_lane) % 128 == 0]
    if not cands:
        return hout                      # fallback: whole image in one block
    multi = [th for th in cands if hout // th >= 2] or cands
    return min(multi, key=lambda th: abs(th * w_lane - target_lanes))


def _dalle_conv2d_kernel(x_ref, w_ref, m_ref, b_ref, o_ref, *, kw, pad, w_lane):
    """One grid step = one (image, output-row-block).

    x_ref: (Cin, L)           H-padded input rows for this block, flattened
                              row-major and zero-padded by `pad` on the left /
                              `kw-1-pad` on the right along the flat axis.
    w_ref: (kw*kw, Cout, Cin) filter taps, tap index t = dh*kw + dw.
    m_ref: (kw, TM)           f32 column-validity mask per dw (zero where the
                              window reads outside [0, W)).
    b_ref: (Cout, 1)          f32 bias.
    o_ref: (Cout, TM)         TM = TH * W, lane-dense output block.
    """
    tm = o_ref.shape[-1]
    acc = jnp.zeros(o_ref.shape, dtype=jnp.float32)
    for dh in range(kw):                 # kw*kw accumulating MXU matmuls
        for dw in range(kw):
            # Output flat position m reads input flat position m + dh*W + dw.
            win = x_ref[:, pl.ds(dh * w_lane + dw, tm)]            # (Cin, TM)
            tap = jnp.dot(w_ref[dh * kw + dw], win,
                          preferred_element_type=jnp.float32)      # (Cout, TM)
            if dw != pad:    # boundary taps: zero columns that fell off-image
                tap = tap * m_ref[dw:dw + 1, :]
            acc = acc + tap
    o_ref[...] = (acc + b_ref[...]).astype(o_ref.dtype)            # bias once


def dalle_conv2d(x_nchw, w_oihw, b, kw, *, compute_dtype=jnp.bfloat16,
                 block_rows=None):
    """Pallas TPU implementation of DalleConv2d.forward.

    x_nchw: (N, Cin, H, W) float32
    w_oihw: (Cout, Cin, kw, kw) float32
    b:      (Cout,) float32
    Returns (N, Cout, Hout, Wout) in x_nchw.dtype (stride 1, pad=(kw-1)//2).
    compute_dtype: MXU operand dtype (bf16 default; accumulation always f32).
    """
    N, Cin, H, W = x_nchw.shape
    Cout = w_oihw.shape[0]
    pad = (kw - 1) // 2
    Hout = H + 2 * pad - kw + 1          # matches torch for even kw too
    Wout = W + 2 * pad - kw + 1
    w_lane = W                           # compute width (== Wout for odd kw)

    TH = block_rows if block_rows is not None else _pick_block_rows(Hout, w_lane)
    assert Hout % TH == 0, (Hout, TH)
    HB = Hout // TH                      # spatial ("parallel") grid axis
    TM = TH * w_lane                     # output lane tile
    TH_in = TH + kw - 1                  # input rows incl. halo
    L = TH_in * w_lane + (kw - 1)        # flat input block length

    # ---- wrapper layout plumbing (no im2col: the only copy of x is the
    #      halo-overlapped row blocking, <= (TH+kw-1)/TH of x) --------------
    x_hp = jnp.pad(x_nchw, ((0, 0), (0, 0), (pad, pad), (0, 0)))   # H-pad only
    xb = jnp.stack(
        [x_hp[:, :, hb * TH: hb * TH + TH_in, :] for hb in range(HB)], axis=1)
    xb = xb.reshape(N, HB, Cin, TH_in * w_lane)
    # Flat-pad so every tap window (offset dh*W + dw, length TM) is in-bounds.
    xb = jnp.pad(xb, ((0, 0), (0, 0), (0, 0), (pad, kw - 1 - pad)))
    xb = xb.astype(compute_dtype)                                   # (N,HB,Cin,L)

    # Filters as (kw*kw, Cout, Cin); bf16 operands / f32 accumulation.
    w_r = (jnp.transpose(w_oihw, (2, 3, 0, 1))
           .reshape(kw * kw, Cout, Cin).astype(compute_dtype))
    b2 = b.reshape(Cout, 1).astype(jnp.float32)

    # Per-dw lane mask: column w valid for tap dw iff 0 <= w + dw - pad < W.
    cols = jnp.arange(TM, dtype=jnp.int32) % w_lane
    dws = jnp.arange(kw, dtype=jnp.int32).reshape(kw, 1)
    mask = ((cols[None, :] + dws - pad >= 0)
            & (cols[None, :] + dws - pad < w_lane)).astype(jnp.float32)

    kernel = functools.partial(_dalle_conv2d_kernel, kw=kw, pad=pad,
                               w_lane=w_lane)

    cdt = np.dtype(compute_dtype).itemsize
    odt = np.dtype(x_nchw.dtype).itemsize
    cost = pl.CostEstimate(
        flops=2 * N * Cout * Cin * kw * kw * Hout * w_lane,
        transcendentals=0,
        bytes_accessed=(N * HB * Cin * L * cdt + kw * kw * Cout * Cin * cdt
                        + kw * TM * 4 + Cout * 4
                        + N * Cout * Hout * w_lane * odt))

    out = pl.pallas_call(
        kernel,
        out_shape=jax.ShapeDtypeStruct((N, Cout, Hout * w_lane), x_nchw.dtype),
        grid_spec=pltpu.PrefetchScalarGridSpec(
            num_scalar_prefetch=0,
            grid=(N, HB),
            in_specs=[
                pl.BlockSpec((None, None, Cin, L), lambda n, hb: (n, hb, 0, 0)),
                pl.BlockSpec((kw * kw, Cout, Cin), lambda n, hb: (0, 0, 0)),
                pl.BlockSpec((kw, TM), lambda n, hb: (0, 0)),
                pl.BlockSpec((Cout, 1), lambda n, hb: (0, 0)),
            ],
            out_specs=pl.BlockSpec((None, Cout, TM), lambda n, hb: (n, 0, hb)),
        ),
        compiler_params=pltpu.CompilerParams(
            dimension_semantics=("parallel", "parallel")),
        cost_estimate=cost,
    )(xb, w_r, mask, b2)

    out = out.reshape(N, Cout, Hout, w_lane)
    return out if Wout == w_lane else out[..., :Wout]


if __name__ == "__main__":
    # Module config (small shapes consistent with the forward pass).
    n_in, n_out, kw = 4, 8, 3
    N, H, W = 2, 16, 16

    key = jax.random.PRNGKey(0)
    k_w, k_b, k_x = jax.random.split(key, 3)

    # DalleConv2d.__init__: w ~ N(0, 1/sqrt(n_in*kw^2)), b = 0.  A nonzero
    # bias is used here purely to exercise the bias path of the kernel.
    std = 1.0 / math.sqrt(n_in * kw ** 2)
    w = jax.random.normal(k_w, (n_out, n_in, kw, kw), dtype=jnp.float32) * std
    b = jax.random.normal(k_b, (n_out,), dtype=jnp.float32) * 0.1
    x = jax.random.normal(k_x, (N, n_in, H, W), dtype=jnp.float32)

    pad = (kw - 1) // 2
    y_ref = lax.conv_general_dilated(
        x, w, window_strides=(1, 1), padding=[(pad, pad), (pad, pad)],
        dimension_numbers=("NCHW", "OIHW", "NCHW"),
    ) + b.reshape(1, n_out, 1, 1)

    # Default production path: bf16 MXU operands, f32 accumulation.
    y = jax.block_until_ready(dalle_conv2d(x, w, b, kw))
    assert y.shape == y_ref.shape, (y.shape, y_ref.shape)
    assert jnp.allclose(y, y_ref, atol=3e-2, rtol=3e-2)

    # Full-precision path for a tight check.
    y32 = jax.block_until_ready(
        dalle_conv2d(x, w, b, kw, compute_dtype=jnp.float32))
    assert jnp.allclose(y32, y_ref, atol=1e-3, rtol=1e-3)

    print("KERNEL_OK")
</pallas_src>

<mosaic_0001>
module attributes {stable_mosaic.version = 11 : i64} {
  func.func @_dalle_conv2d_kernel(%arg0: i32, %arg1: i32, %arg2: memref<1x1x4x162xbf16, #tpu.memory_space<vmem>>, %arg3: memref<9x8x4xbf16, #tpu.memory_space<vmem>>, %arg4: memref<3x128xf32, #tpu.memory_space<vmem>>, %arg5: memref<8x1xf32, #tpu.memory_space<vmem>>, %arg6: memref<1x8x128xf32, #tpu.memory_space<vmem>>) attributes {dimension_semantics = [#tpu.dimension_semantics<parallel>, #tpu.dimension_semantics<parallel>], iteration_bounds = array<i64: 2, 2>, scalar_prefetch = 0 : i64, scratch_operands = 0 : i64, tpu.core_type = #tpu.core_type<tc>, window_params = [{transform_indices = @transform_0, window_bounds = array<i64: 1, 1, 4, 162>}, {pipeline_mode = #tpu.pipeline_mode<synchronous>, transform_indices = @transform_1, window_bounds = array<i64: 9, 8, 4>}, {pipeline_mode = #tpu.pipeline_mode<synchronous>, transform_indices = @transform_2, window_bounds = array<i64: 3, 128>}, {pipeline_mode = #tpu.pipeline_mode<synchronous>, transform_indices = @transform_3, window_bounds = array<i64: 8, 1>}, {transform_indices = @transform_4, window_bounds = array<i64: 1, 8, 128>}]} {
    %cst = arith.constant 0.000000e+00 : f32
    %0 = vector.broadcast %cst : f32 to vector<8x128xf32>
    %c0 = arith.constant 0 : index
    %c0_0 = arith.constant 0 : index
    %c0_1 = arith.constant 0 : index
    %c0_2 = arith.constant 0 : index
    %1 = vector.load %arg2[%c0, %c0_0, %c0_1, %c0_2] : memref<1x1x4x162xbf16, #tpu.memory_space<vmem>>, vector<1x1x4x128xbf16>
    %2 = vector.shape_cast %1 : vector<1x1x4x128xbf16> to vector<4x128xbf16>
    %c0_3 = arith.constant 0 : index
    %c0_4 = arith.constant 0 : index
    %c0_5 = arith.constant 0 : index
    %3 = vector.load %arg3[%c0_3, %c0_4, %c0_5] : memref<9x8x4xbf16, #tpu.memory_space<vmem>>, vector<1x8x4xbf16>
    %4 = vector.shape_cast %3 : vector<1x8x4xbf16> to vector<8x4xbf16>
    %cst_6 = arith.constant dense<0.000000e+00> : vector<8x128xf32>
    %5 = tpu.matmul %4, %2, %cst_6 {dimension_numbers = #tpu.dot_dimension_numbers<[1], [0], [0], [1], [0, 0, 1, 1], [], []>} : vector<8x4xbf16>, vector<4x128xbf16>, vector<8x128xf32> -> vector<8x128xf32>
    %c0_7 = arith.constant 0 : index
    %c0_8 = arith.constant 0 : index
    %6 = vector.load %arg4[%c0_7, %c0_8] : memref<3x128xf32, #tpu.memory_space<vmem>>, vector<1x128xf32>
    %7 = vector.broadcast %6 : vector<1x128xf32> to vector<8x128xf32>
    %8 = arith.mulf %5, %7 : vector<8x128xf32>
    %9 = arith.addf %0, %8 : vector<8x128xf32>
    %c0_9 = arith.constant 0 : index
    %c0_10 = arith.constant 0 : index
    %c0_11 = arith.constant 0 : index
    %c1 = arith.constant 1 : index
    %10 = vector.load %arg2[%c0_9, %c0_10, %c0_11, %c1] : memref<1x1x4x162xbf16, #tpu.memory_space<vmem>>, vector<1x1x4x128xbf16>
    %11 = vector.shape_cast %10 : vector<1x1x4x128xbf16> to vector<4x128xbf16>
    %c1_12 = arith.constant 1 : index
    %c0_13 = arith.constant 0 : index
    %c0_14 = arith.constant 0 : index
    %12 = vector.load %arg3[%c1_12, %c0_13, %c0_14] : memref<9x8x4xbf16, #tpu.memory_space<vmem>>, vector<1x8x4xbf16>
    %13 = vector.shape_cast %12 : vector<1x8x4xbf16> to vector<8x4xbf16>
    %cst_15 = arith.constant dense<0.000000e+00> : vector<8x128xf32>
    %14 = tpu.matmul %13, %11, %cst_15 {dimension_numbers = #tpu.dot_dimension_numbers<[1], [0], [0], [1], [0, 0, 1, 1], [], []>} : vector<8x4xbf16>, vector<4x128xbf16>, vector<8x128xf32> -> vector<8x128xf32>
    %15 = arith.addf %9, %14 : vector<8x128xf32>
    %c0_16 = arith.constant 0 : index
    %c0_17 = arith.constant 0 : index
    %c0_18 = arith.constant 0 : index
    %c2 = arith.constant 2 : index
    %16 = vector.load %arg2[%c0_16, %c0_17, %c0_18, %c2] : memref<1x1x4x162xbf16, #tpu.memory_space<vmem>>, vector<1x1x4x128xbf16>
    %17 = vector.shape_cast %16 : vector<1x1x4x128xbf16> to vector<4x128xbf16>
    %c2_19 = arith.constant 2 : index
    %c0_20 = arith.constant 0 : index
    %c0_21 = arith.constant 0 : index
    %18 = vector.load %arg3[%c2_19, %c0_20, %c0_21] : memref<9x8x4xbf16, #tpu.memory_space<vmem>>, vector<1x8x4xbf16>
    %19 = vector.shape_cast %18 : vector<1x8x4xbf16> to vector<8x4xbf16>
    %cst_22 = arith.constant dense<0.000000e+00> : vector<8x128xf32>
    %20 = tpu.matmul %19, %17, %cst_22 {dimension_numbers = #tpu.dot_dimension_numbers<[1], [0], [0], [1], [0, 0, 1, 1], [], []>} : vector<8x4xbf16>, vector<4x128xbf16>, vector<8x128xf32> -> vector<8x128xf32>
    %c2_23 = arith.constant 2 : index
    %c0_24 = arith.constant 0 : index
    %21 = vector.load %arg4[%c2_23, %c0_24] : memref<3x128xf32, #tpu.memory_space<vmem>>, vector<1x128xf32>
    %22 = vector.broadcast %21 : vector<1x128xf32> to vector<8x128xf32>
    %23 = arith.mulf %20, %22 : vector<8x128xf32>
    %24 = arith.addf %15, %23 : vector<8x128xf32>
    %c0_25 = arith.constant 0 : index
    %c0_26 = arith.constant 0 : index
    %c0_27 = arith.constant 0 : index
    %c16 = arith.constant 16 : index
    %25 = vector.load %arg2[%c0_25, %c0_26, %c0_27, %c16] : memref<1x1x4x162xbf16, #tpu.memory_space<vmem>>, vector<1x1x4x128xbf16>
    %26 = vector.shape_cast %25 : vector<1x1x4x128xbf16> to vector<4x128xbf16>
    %c3 = arith.constant 3 : index
    %c0_28 = arith.constant 0 : index
    %c0_29 = arith.constant 0 : index
    %27 = vector.load %arg3[%c3, %c0_28, %c0_29] : memref<9x8x4xbf16, #tpu.memory_space<vmem>>, vector<1x8x4xbf16>
    %28 = vector.shape_cast %27 : vector<1x8x4xbf16> to vector<8x4xbf16>
    %cst_30 = arith.constant dense<0.000000e+00> : vector<8x128xf32>
    %29 = tpu.matmul %28, %26, %cst_30 {dimension_numbers = #tpu.dot_dimension_numbers<[1], [0], [0], [1], [0, 0, 1, 1], [], []>} : vector<8x4xbf16>, vector<4x128xbf16>, vector<8x128xf32> -> vector<8x128xf32>
    %c0_31 = arith.constant 0 : index
    %c0_32 = arith.constant 0 : index
    %30 = vector.load %arg4[%c0_31, %c0_32] : memref<3x128xf32, #tpu.memory_space<vmem>>, vector<1x128xf32>
    %31 = vector.broadcast %30 : vector<1x128xf32> to vector<8x128xf32>
    %32 = arith.mulf %29, %31 : vector<8x128xf32>
    %33 = arith.addf %24, %32 : vector<8x128xf32>
    %c0_33 = arith.constant 0 : index
    %c0_34 = arith.constant 0 : index
    %c0_35 = arith.constant 0 : index
    %c17 = arith.constant 17 : index
    %34 = vector.load %arg2[%c0_33, %c0_34, %c0_35, %c17] : memref<1x1x4x162xbf16, #tpu.memory_space<vmem>>, vector<1x1x4x128xbf16>
    %35 = vector.shape_cast %34 : vector<1x1x4x128xbf16> to vector<4x128xbf16>
    %c4 = arith.constant 4 : index
    %c0_36 = arith.constant 0 : index
    %c0_37 = arith.constant 0 : index
    %36 = vector.load %arg3[%c4, %c0_36, %c0_37] : memref<9x8x4xbf16, #tpu.memory_space<vmem>>, vector<1x8x4xbf16>
    %37 = vector.shape_cast %36 : vector<1x8x4xbf16> to vector<8x4xbf16>
    %cst_38 = arith.constant dense<0.000000e+00> : vector<8x128xf32>
    %38 = tpu.matmul %37, %35, %cst_38 {dimension_numbers = #tpu.dot_dimension_numbers<[1], [0], [0], [1], [0, 0, 1, 1], [], []>} : vector<8x4xbf16>, vector<4x128xbf16>, vector<8x128xf32> -> vector<8x128xf32>
    %39 = arith.addf %33, %38 : vector<8x128xf32>
    %c0_39 = arith.constant 0 : index
    %c0_40 = arith.constant 0 : index
    %c0_41 = arith.constant 0 : index
    %c18 = arith.constant 18 : index
    %40 = vector.load %arg2[%c0_39, %c0_40, %c0_41, %c18] : memref<1x1x4x162xbf16, #tpu.memory_space<vmem>>, vector<1x1x4x128xbf16>
    %41 = vector.shape_cast %40 : vector<1x1x4x128xbf16> to vector<4x128xbf16>
    %c5 = arith.constant 5 : index
    %c0_42 = arith.constant 0 : index
    %c0_43 = arith.constant 0 : index
    %42 = vector.load %arg3[%c5, %c0_42, %c0_43] : memref<9x8x4xbf16, #tpu.memory_space<vmem>>, vector<1x8x4xbf16>
    %43 = vector.shape_cast %42 : vector<1x8x4xbf16> to vector<8x4xbf16>
    %cst_44 = arith.constant dense<0.000000e+00> : vector<8x128xf32>
    %44 = tpu.matmul %43, %41, %cst_44 {dimension_numbers = #tpu.dot_dimension_numbers<[1], [0], [0], [1], [0, 0, 1, 1], [], []>} : vector<8x4xbf16>, vector<4x128xbf16>, vector<8x128xf32> -> vector<8x128xf32>
    %c2_45 = arith.constant 2 : index
    %c0_46 = arith.constant 0 : index
    %45 = vector.load %arg4[%c2_45, %c0_46] : memref<3x128xf32, #tpu.memory_space<vmem>>, vector<1x128xf32>
    %46 = vector.broadcast %45 : vector<1x128xf32> to vector<8x128xf32>
    %47 = arith.mulf %44, %46 : vector<8x128xf32>
    %48 = arith.addf %39, %47 : vector<8x128xf32>
    %c0_47 = arith.constant 0 : index
    %c0_48 = arith.constant 0 : index
    %c0_49 = arith.constant 0 : index
    %c32 = arith.constant 32 : index
    %49 = vector.load %arg2[%c0_47, %c0_48, %c0_49, %c32] : memref<1x1x4x162xbf16, #tpu.memory_space<vmem>>, vector<1x1x4x128xbf16>
    %50 = vector.shape_cast %49 : vector<1x1x4x128xbf16> to vector<4x128xbf16>
    %c6 = arith.constant 6 : index
    %c0_50 = arith.constant 0 : index
    %c0_51 = arith.constant 0 : index
    %51 = vector.load %arg3[%c6, %c0_50, %c0_51] : memref<9x8x4xbf16, #tpu.memory_space<vmem>>, vector<1x8x4xbf16>
    %52 = vector.shape_cast %51 : vector<1x8x4xbf16> to vector<8x4xbf16>
    %cst_52 = arith.constant dense<0.000000e+00> : vector<8x128xf32>
    %53 = tpu.matmul %52, %50, %cst_52 {dimension_numbers = #tpu.dot_dimension_numbers<[1], [0], [0], [1], [0, 0, 1, 1], [], []>} : vector<8x4xbf16>, vector<4x128xbf16>, vector<8x128xf32> -> vector<8x128xf32>
    %c0_53 = arith.constant 0 : index
    %c0_54 = arith.constant 0 : index
    %54 = vector.load %arg4[%c0_53, %c0_54] : memref<3x128xf32, #tpu.memory_space<vmem>>, vector<1x128xf32>
    %55 = vector.broadcast %54 : vector<1x128xf32> to vector<8x128xf32>
    %56 = arith.mulf %53, %55 : vector<8x128xf32>
    %57 = arith.addf %48, %56 : vector<8x128xf32>
    %c0_55 = arith.constant 0 : index
    %c0_56 = arith.constant 0 : index
    %c0_57 = arith.constant 0 : index
    %c33 = arith.constant 33 : index
    %58 = vector.load %arg2[%c0_55, %c0_56, %c0_57, %c33] : memref<1x1x4x162xbf16, #tpu.memory_space<vmem>>, vector<1x1x4x128xbf16>
    %59 = vector.shape_cast %58 : vector<1x1x4x128xbf16> to vector<4x128xbf16>
    %c7 = arith.constant 7 : index
    %c0_58 = arith.constant 0 : index
    %c0_59 = arith.constant 0 : index
    %60 = vector.load %arg3[%c7, %c0_58, %c0_59] : memref<9x8x4xbf16, #tpu.memory_space<vmem>>, vector<1x8x4xbf16>
    %61 = vector.shape_cast %60 : vector<1x8x4xbf16> to vector<8x4xbf16>
    %cst_60 = arith.constant dense<0.000000e+00> : vector<8x128xf32>
    %62 = tpu.matmul %61, %59, %cst_60 {dimension_numbers = #tpu.dot_dimension_numbers<[1], [0], [0], [1], [0, 0, 1, 1], [], []>} : vector<8x4xbf16>, vector<4x128xbf16>, vector<8x128xf32> -> vector<8x128xf32>
    %63 = arith.addf %57, %62 : vector<8x128xf32>
    %c0_61 = arith.constant 0 : index
    %c0_62 = arith.constant 0 : index
    %c0_63 = arith.constant 0 : index
    %c34 = arith.constant 34 : index
    %64 = vector.load %arg2[%c0_61, %c0_62, %c0_63, %c34] : memref<1x1x4x162xbf16, #tpu.memory_space<vmem>>, vector<1x1x4x128xbf16>
    %65 = vector.shape_cast %64 : vector<1x1x4x128xbf16> to vector<4x128xbf16>
    %c8 = arith.constant 8 : index
    %c0_64 = arith.constant 0 : index
    %c0_65 = arith.constant 0 : index
    %66 = vector.load %arg3[%c8, %c0_64, %c0_65] : memref<9x8x4xbf16, #tpu.memory_space<vmem>>, vector<1x8x4xbf16>
    %67 = vector.shape_cast %66 : vector<1x8x4xbf16> to vector<8x4xbf16>
    %cst_66 = arith.constant dense<0.000000e+00> : vector<8x128xf32>
    %68 = tpu.matmul %67, %65, %cst_66 {dimension_numbers = #tpu.dot_dimension_numbers<[1], [0], [0], [1], [0, 0, 1, 1], [], []>} : vector<8x4xbf16>, vector<4x128xbf16>, vector<8x128xf32> -> vector<8x128xf32>
    %c2_67 = arith.constant 2 : index
    %c0_68 = arith.constant 0 : index
    %69 = vector.load %arg4[%c2_67, %c0_68] : memref<3x128xf32, #tpu.memory_space<vmem>>, vector<1x128xf32>
    %70 = vector.broadcast %69 : vector<1x128xf32> to vector<8x128xf32>
    %71 = arith.mulf %68, %70 : vector<8x128xf32>
    %72 = arith.addf %63, %71 : vector<8x128xf32>
    %c0_69 = arith.constant 0 : index
    %c0_70 = arith.constant 0 : index
    %73 = vector.load %arg5[%c0_69, %c0_70] : memref<8x1xf32, #tpu.memory_space<vmem>>, vector<8x1xf32>
    %74 = vector.broadcast %73 : vector<8x1xf32> to vector<8x128xf32>
    %75 = arith.addf %72, %74 : vector<8x128xf32>
    %c0_71 = arith.constant 0 : index
    %c0_72 = arith.constant 0 : index
    %c0_73 = arith.constant 0 : index
    %76 = vector.load %arg6[%c0_71, %c0_72, %c0_73] : memref<1x8x128xf32, #tpu.memory_space<vmem>>, vector<1x8x128xf32>
    %77 = vector.shape_cast %76 : vector<1x8x128xf32> to vector<8x128xf32>
    %78 = vector.shape_cast %75 : vector<8x128xf32> to vector<1x8x128xf32>
    tpu.vector_store %arg6[%c0_71, %c0_72, %c0_73], %78 {strides = array<i32>} : memref<1x8x128xf32, #tpu.memory_space<vmem>>, vector<1x8x128xf32>,
    return
  }
  func.func @transform_0(%arg0: i32, %arg1: i32) -> (i32, i32, i32, i32) {
    %c0_i32 = arith.constant 0 : i32
    %c0_i32_0 = arith.constant 0 : i32
    %c0_i32_1 = arith.constant 0 : i32
    return %arg0, %arg1, %c0_i32, %c0_i32_0 : i32, i32, i32, i32
  }
  func.func @transform_1(%arg0: i32, %arg1: i32) -> (i32, i32, i32) {
    %c0_i32 = arith.constant 0 : i32
    %c0_i32_0 = arith.constant 0 : i32
    %c0_i32_1 = arith.constant 0 : i32
    %c0_i32_2 = arith.constant 0 : i32
    return %c0_i32, %c0_i32_0, %c0_i32_1 : i32, i32, i32
  }
  func.func @transform_2(%arg0: i32, %arg1: i32) -> (i32, i32) {
    %c0_i32 = arith.constant 0 : i32
    %c0_i32_0 = arith.constant 0 : i32
    %c0_i32_1 = arith.constant 0 : i32
    return %c0_i32, %c0_i32_0 : i32, i32
  }
  func.func @transform_3(%arg0: i32, %arg1: i32) -> (i32, i32) {
    %c0_i32 = arith.constant 0 : i32
    %c0_i32_0 = arith.constant 0 : i32
    %c0_i32_1 = arith.constant 0 : i32
    return %c0_i32, %c0_i32_0 : i32, i32
  }
  func.func @transform_4(%arg0: i32, %arg1: i32) -> (i32, i32, i32) {
    %c0_i32 = arith.constant 0 : i32
    %c0_i32_0 = arith.constant 0 : i32
    return %arg0, %c0_i32, %arg1 : i32, i32, i32
  }
}

</mosaic_0001>

<llo_original>
// kernel: tpu_custom_call.1
$region0: #{tpu_custom_call.1}
  #allocation0 [shape = 'u32[]', space=smem, size = 0x4, offset = 0x4, fixed_abs, tag = 'smem constant byte address 0x4 - core index']
  #allocation1 [shape = 'u32[72,128]{1,0:T(1,128)}', space=vmem, size = 0x9000, scoped, tag = 'internal scratch']
  %s0 = inlined_call_operand.vmem [shape: bf16[2,2,4,162], index: 0, kind: input, shape index: {}]
  %s1 = inlined_call_operand.vmem [shape: bf16[9,8,4], index: 1, kind: input, shape index: {}]
  %s2 = inlined_call_operand.vmem [shape: f32[3,128], index: 2, kind: input, shape index: {}]
  %s3 = inlined_call_operand.vmem [shape: f32[8,1], index: 3, kind: input, shape index: {}]
  %s4 = inlined_call_operand.hbm [shape: f32[2,8,256], index: 4, kind: output, shape index: {}]
  %s5 = sld [smem:[#allocation0]]
  $region49: #{tpu_custom_call.1} parent=0
    _
  %s7 = ssub.s32 1, %s5
  %s8 = scalar_select 0, %s7, %s5
  $region1: #{tpu_custom_call.1} parent=0
    #allocation2 [shape = 'u8[8192]{0}', space=vmem, size = 0x2000, scoped, tag = 'output window, operand 0']
    #allocation3 [shape = 's32[2]{0}', space=sflag, size = 0x8, scoped, tag = 'scoped memory for tpu_custom_call.1']
    %9 = vsyncpa [#allocation3], 0
    %s10 = scalar_lea.sflag [#allocation3], 1
    %11 = vsyncpa %s10, 0
    loop: start=0, step=1, limit=6
    $region2: #{tpu_custom_call.1} parent=1 // loop_pre_header
      _
    $region3: #{tpu_custom_call.1} parent=1 // loop_header
      %s13 = sphi 0, %s17
      %p14 = scmp.ge.s32.totalorder %s13, 6
      %s20 = sphi 0, %s32
      %s21 = sphi 0, %s28
      %s22 = sphi 0, %s20
      %s23 = sphi 0, %s21
      %s24 = sphi 0, %s22
      %s25 = sphi 0, %s23
      %s37 = sphi 0, %s39
      %s40 = sphi 0, %s37
      %s41 = sphi 0, %s40
      %s57 = sphi 0, %s41
      %s61 = sphi 0, %s61
      %s63 = sphi 0, %s61
      %s64 = sphi 0, %s63
      %s78 = sphi 0, %s64
      %s82 = sphi 0, %s82
      %s84 = sphi 0, %s82
      %s85 = sphi 0, %s84
      %s99 = sphi 0, %s85
      %s103 = sphi 0, %s103
      %s105 = sphi 0, %s103
      %s106 = sphi 0, %s105
      %s120 = sphi 0, %s106
      %s128 = sphi 0, %s130
      %s131 = sphi 0, %s128
      %s132 = sphi 0, %s131
      %s148 = sphi 0, %s132
    $region4: #{tpu_custom_call.1} parent=1 // loop_header_branch
      %16 = sbr.rel (%p14) target = $region8
    $region5: #{tpu_custom_call.1} parent=1 // loop_body
      %s18 = ssub.s32 %s13, 1
      %s19 = ssub.s32 %s13, 2
      %s26 = sadd.s32 1, %s21
      %p27 = scmp.ge.s32.totalorder %s26, 2
      %s28 = scalar_select %p27, 0, %s26
      %s29 = sadd.s32 1, %s20
      %s30 = scalar_select %p27, %s29, %s20
      %p31 = scmp.ge.s32.totalorder %s30, 2
      %s32 = scalar_select %p31, 0, %s30
      %s33 = ssub.s32 %s20, %s32
      %s34 = ssub.s32 %s21, %s28
      %s35 = sor.u32 %s33, %s34
      %p36 = scmp.eq.s32.totalorder %s35, 0
      %s38 = sadd.s32 %s37, 1
      %s39 = scalar_select %p36, %s37, %s38
      %p42 = pneg %p36
      %p43 = scmp.eq.s32.totalorder %s13, 3
      %p44 = por %p42, %p43
      %p45 = scmp.ne.s32.totalorder %s37, %s40
      %p46 = scmp.eq.s32.totalorder %s13, 0
      %p47 = por %p45, %p46
      %p48 = scmp.ne.s32.totalorder %s37, %s40
      %p49 = scmp.eq.s32.totalorder %s18, 3
      %p50 = por %p48, %p49
      %p51 = scmp.ne.s32.totalorder %s40, %s41
      %p52 = scmp.eq.s32.totalorder %s18, 0
      %p53 = por %p51, %p52
      %p54 = scmp.ne.s32.totalorder %s40, %s41
      %p55 = scmp.eq.s32.totalorder %s19, 3
      %p56 = por %p54, %p55
      %p58 = scmp.ne.s32.totalorder %s41, %s57
      %p59 = scmp.eq.s32.totalorder %s19, 0
      %p60 = por %p58, %p59
      %s62 = sadd.s32 %s61, 1
      %p65 = scmp.eq.s32.totalorder %s13, 3
      %p66 = scmp.ne.s32.totalorder %s61, %s63
      %p67 = scmp.eq.s32.totalorder %s13, 0
      %p68 = por %p66, %p67
      %p69 = scmp.ne.s32.totalorder %s61, %s63
      %p70 = scmp.eq.s32.totalorder %s18, 3
      %p71 = por %p69, %p70
      %p72 = scmp.ne.s32.totalorder %s63, %s64
      %p73 = scmp.eq.s32.totalorder %s18, 0
      %p74 = por %p72, %p73
      %p75 = scmp.ne.s32.totalorder %s63, %s64
      %p76 = scmp.eq.s32.totalorder %s19, 3
      %p77 = por %p75, %p76
      %p79 = scmp.ne.s32.totalorder %s64, %s78
      %p80 = scmp.eq.s32.totalorder %s19, 0
      %p81 = por %p79, %p80
      %s83 = sadd.s32 %s82, 1
      %p86 = scmp.eq.s32.totalorder %s13, 3
      %p87 = scmp.ne.s32.totalorder %s82, %s84
      %p88 = scmp.eq.s32.totalorder %s13, 0
      %p89 = por %p87, %p88
      %p90 = scmp.ne.s32.totalorder %s82, %s84
      %p91 = scmp.eq.s32.totalorder %s18, 3
      %p92 = por %p90, %p91
      %p93 = scmp.ne.s32.totalorder %s84, %s85
      %p94 = scmp.eq.s32.totalorder %s18, 0
      %p95 = por %p93, %p94
      %p96 = scmp.ne.s32.totalorder %s84, %s85
      %p97 = scmp.eq.s32.totalorder %s19, 3
      %p98 = por %p96, %p97
      %p100 = scmp.ne.s32.totalorder %s85, %s99
      %p101 = scmp.eq.s32.totalorder %s19, 0
      %p102 = por %p100, %p101
      %s104 = sadd.s32 %s103, 1
      %p107 = scmp.eq.s32.totalorder %s13, 3
      %p108 = scmp.ne.s32.totalorder %s103, %s105
      %p109 = scmp.eq.s32.totalorder %s13, 0
      %p110 = por %p108, %p109
      %p111 = scmp.ne.s32.totalorder %s103, %s105
      %p112 = scmp.eq.s32.totalorder %s18, 3
      %p113 = por %p111, %p112
      %p114 = scmp.ne.s32.totalorder %s105, %s106
      %p115 = scmp.eq.s32.totalorder %s18, 0
      %p116 = por %p114, %p115
      %p117 = scmp.ne.s32.totalorder %s105, %s106
      %p118 = scmp.eq.s32.totalorder %s19, 3
      %p119 = por %p117, %p118
      %p121 = scmp.ne.s32.totalorder %s106, %s120
      %p122 = scmp.eq.s32.totalorder %s19, 0
      %p123 = por %p121, %p122
      %s124 = ssub.s32 %s20, %s32
      %s125 = ssub.s32 %s21, %s28
      %s126 = sor.u32 %s124, %s125
      %p127 = scmp.eq.s32.totalorder %s126, 0
      %s129 = sadd.s32 %s128, 1
      %s130 = scalar_select %p127, %s128, %s129
      %p133 = pneg %p127
      %p134 = scmp.eq.s32.totalorder %s13, 3
      %p135 = por %p133, %p134
      %p136 = scmp.ne.s32.totalorder %s128, %s131
      %p137 = scmp.eq.s32.totalorder %s13, 0
      %p138 = por %p136, %p137
      %p139 = scmp.ne.s32.totalorder %s128, %s131
      %p140 = scmp.eq.s32.totalorder %s18, 3
      %p141 = por %p139, %p140
      %p142 = scmp.ne.s32.totalorder %s131, %s132
      %p143 = scmp.eq.s32.totalorder %s18, 0
      %p144 = por %p142, %p143
      %p145 = scmp.ne.s32.totalorder %s131, %s132
      %p146 = scmp.eq.s32.totalorder %s19, 3
      %p147 = por %p145, %p146
      %p149 = scmp.ne.s32.totalorder %s132, %s148
      %p150 = scmp.eq.s32.totalorder %s19, 0
      %p151 = por %p149, %p150
      %p152 = scmp.le.s32.totalorder 1, %s13
      %p153 = scmp.lt.s32.totalorder %s13, 5
      %p154 = pnand %p152, %p153
      %p155 = pneg %p154
      // Predicated region
      $region9: #{tpu_custom_call.1} parent=5 // pred_check
        _
      $region10: #{tpu_custom_call.1} parent=5 // pred_check_branch
        %157 = sbr.rel (%p154) target = $region12
      $region11: #{tpu_custom_call.1} parent=5 // pred_region
        %s158 = ssub.s32 %s13, 1
        // Predicated region
        $region13: #{tpu_custom_call.1} parent=11 // pred_check
          %p159 = pneg %p74
        $region14: #{tpu_custom_call.1} parent=11 // pred_check_branch
          %161 = sbr.rel (%p159) target = $region16
        $region15: #{tpu_custom_call.1} parent=11 // pred_region
          _
        $region16: #{tpu_custom_call.1} parent=11 // pred_fallthru
          _
        // Predicated region
        $region17: #{tpu_custom_call.1} parent=11 // pred_check
          %p162 = pneg %p95
        $region18: #{tpu_custom_call.1} parent=11 // pred_check_branch
          %164 = sbr.rel (%p162) target = $region20
        $region19: #{tpu_custom_call.1} parent=11 // pred_region
          _
        $region20: #{tpu_custom_call.1} parent=11 // pred_fallthru
          _
        // Predicated region
        $region21: #{tpu_custom_call.1} parent=11 // pred_check
          %p165 = pneg %p116
        $region22: #{tpu_custom_call.1} parent=11 // pred_check_branch
          %167 = sbr.rel (%p165) target = $region24
        $region23: #{tpu_custom_call.1} parent=11 // pred_region
          _
        $region24: #{tpu_custom_call.1} parent=11 // pred_fallthru
          _
      $region12: #{tpu_custom_call.1} parent=5 // pred_fallthru
        _
      %p168 = scmp.lt.s32.totalorder %s13, 4
      // Predicated region
      $region25: #{tpu_custom_call.1} parent=5 // pred_check
        %p169 = pneg %p168
      $region26: #{tpu_custom_call.1} parent=5 // pred_check_branch
        %171 = sbr.rel (%p169) target = $region28
      $region27: #{tpu_custom_call.1} parent=5 // pred_region
        // Predicated region
        $region29: #{tpu_custom_call.1} parent=27 // pred_check
          %p172 = pneg %p47
        $region30: #{tpu_custom_call.1} parent=27 // pred_check_branch
          %174 = sbr.rel (%p172) target = $region32
        $region31: #{tpu_custom_call.1} parent=27 // pred_region
          %p175 = scmp.lt.s32.totalorder %s20, 1
          %s176 = scalar_select %p175, %s20, 1
          %p177 = scmp.lt.s32.totalorder %s21, 1
          %s178 = scalar_select %p177, %s21, 1
          %s179 = smul.addr %s178, 2
          %s180 = smul.addr %s176, 4
          %s181 = sadd.s32 %s179, %s180
          %s182 = smul.addr %s181, 2
          %s183 = scalar_lea.vmem %s0, %s182
        $region32: #{tpu_custom_call.1} parent=27 // pred_fallthru
          _
      $region28: #{tpu_custom_call.1} parent=5 // pred_fallthru
        _
      %p184 = scmp.le.s32.totalorder 1, %s13
      %p185 = scmp.lt.s32.totalorder %s13, 5
      %p186 = pnand %p184, %p185
      %p187 = pneg %p186
      // Predicated region
      $region33: #{tpu_custom_call.1} parent=5 // pred_check
        _
      $region34: #{tpu_custom_call.1} parent=5 // pred_check_branch
        %189 = sbr.rel (%p186) target = $region36
      $region35: #{tpu_custom_call.1} parent=5 // pred_region
        %s190 = ssub.s32 %s13, 1
        %p191 = scmp.lt.s32.totalorder %s22, 1
        %s192 = scalar_select %p191, %s22, 1
        %p193 = scmp.lt.s32.totalorder %s23, 1
        %s194 = scalar_select %p193, %s23, 1
        %s195 = smul.addr %s194, 2
        %s196 = smul.addr %s192, 4
        %s197 = sadd.s32 %s195, %s196
        %s198 = smul.addr %s197, 2
        %s199 = scalar_lea.vmem %s0, %s198
        %p200 = pneg %p53
        %p201 = pneg %p50
        %p202 = pneg %p74
        %p203 = pneg %p71
        %p204 = pneg %p95
        %p205 = pneg %p92
        %p206 = pneg %p116
        %p207 = pneg %p113
        %p208 = pneg %p144
        %p209 = pneg %p141
        %s210 = sand.u32 %s131, 1
        %s211 = scalar_lea.sflag [#allocation3], %s210
        %s212 = sand.u32 %s131, 1
        %s213 = smul.addr %s212, 8
        %s214 = scalar_lea.vmem [#allocation2], %s213
        %p215 = scmp.lt.s32.totalorder %s22, 1
        %s216 = scalar_select %p215, %s22, 1
        %p217 = scmp.lt.s32.totalorder %s23, 1
        %s218 = scalar_select %p217, %s23, 1
        %s219 = smul.addr %s218, 2
        %s220 = smul.addr %s216, 4
        %s221 = sadd.s32 %s219, %s220
        %s222 = smul.addr %s221, 2
        %s223 = scalar_lea.vmem %s0, %s222
        %v225 = vld [vmem:[%s223] sm:$0x3]
        %v226 = vld [vmem:[%s1] sm:$0xf]
        %vm227 = vcmask 31744
        %v229 = vsel %vm227, %v226, 0
        %vm231 = vcmask 1041408
        %v233 = vsel %vm231, %v225, 0
        %235 = vmatpush.bf16.msra.mxu0 0
        %236 = vmatpush.bf16.msra.mxu0 0
        %237 = vmatpush.bf16.msra.mxu0 0
        %238 = vmatpush.bf16.msra.mxu0 0
        %239 = vmatpush.bf16.msra.mxu0 0
        %240 = vmatpush.bf16.msra.mxu0 0
        %241 = vmatpush.bf16.msra.mxu0 0
        %242 = vmatpush.bf16.msra.mxu0 %v233
        %243 = vmatmul.bf16.gmra.mxu0 %v229
        %v244 = vpop.f32.mrf.mxu0
        %v245 = vadd.f32 0.0, %v244
        %v246 = vpop.f32.mrf.mxu0
        %247 = vdwg.mxu0
        %v248 = vld [vmem:[%s2] sm:$0x1]
        %v249 = vperm.slane %v248, 0
        %v250 = vmul.f32 %v245, %v249
        %v251 = vadd.f32 %v250, 0.0
        %v252 = vld [vmem:[%s223] sm:$0xf]
        %s253 = scalar_lea.vmem %s1, 4
        %v254 = vld [vmem:[%s253] sm:$0xf]
        %256 = vst [vmem:[#allocation1] ss:$4 sm:$0xff] %v252
        %v257 = vld.sshfl [vmem:[#allocation1] sm:$0xff pattern:$0x73625140]
        %v259 = vld.sshfl [vmem:[#allocation1 + $0x8] sm:$0xff pattern:$0x73625140]
        %261 = vrot.lane.b32.xlu0 %v257, 127
        %v262 = vpop.permute.xlu0 %261
        %263 = vrot.lane.b32.xlu0 %v259, 127
        %v264 = vpop.permute.xlu0 %263
        %vm265 = vcmask 1039360
        %v266 = vsel %vm265, %v262, %v264
        %v268 = vsel %vm227, %v254, 0
        %v271 = vsel %vm231, %v266, 0
        %273 = vmatpush.bf16.msra.mxu0 0
        %274 = vmatpush.bf16.msra.mxu0 0
        %275 = vmatpush.bf16.msra.mxu0 0
        %276 = vmatpush.bf16.msra.mxu0 0
        %277 = vmatpush.bf16.msra.mxu0 0
        %278 = vmatpush.bf16.msra.mxu0 0
        %279 = vmatpush.bf16.msra.mxu0 0
        %280 = vmatpush.bf16.msra.mxu0 %v271
        %281 = vmatmul.bf16.gmra.mxu0 %v268
        %v282 = vpop.f32.mrf.mxu0
        %v283 = vadd.f32 0.0, %v282
        %v284 = vpop.f32.mrf.mxu0
        %285 = vdwg.mxu0
        %v286 = vadd.f32 %v251, %v283
        %v287 = vld [vmem:[%s223] sm:$0xf]
        %s288 = scalar_lea.vmem %s1, 8
        %v289 = vld [vmem:[%s288] sm:$0xf]
        %291 = vst [vmem:[#allocation1] ss:$4 sm:$0xff] %v287
        %v292 = vld.sshfl [vmem:[#allocation1] sm:$0xff pattern:$0x73625140]
        %v294 = vld.sshfl [vmem:[#allocation1 + $0x8] sm:$0xff pattern:$0x73625140]
        %296 = vrot.lane.b32.xlu0 %v292, 126
        %v297 = vpop.permute.xlu0 %296
        %298 = vrot.lane.b32.xlu0 %v294, 126
        %v299 = vpop.permute.xlu0 %298
        %vm300 = vcmask 1031168
        %v301 = vsel %vm300, %v297, %v299
        %v303 = vsel %vm227, %v289, 0
        %v306 = vsel %vm231, %v301, 0
        %308 = vmatpush.bf16.msra.mxu0 0
        %309 = vmatpush.bf16.msra.mxu0 0
        %310 = vmatpush.bf16.msra.mxu0 0
        %311 = vmatpush.bf16.msra.mxu0 0
        %312 = vmatpush.bf16.msra.mxu0 0
        %313 = vmatpush.bf16.msra.mxu0 0
        %314 = vmatpush.bf16.msra.mxu0 0
        %315 = vmatpush.bf16.msra.mxu0 %v306
        %316 = vmatmul.bf16.gmra.mxu0 %v303
        %v317 = vpop.f32.mrf.mxu0
        %v318 = vadd.f32 0.0, %v317
        %v319 = vpop.f32.mrf.mxu0
        %320 = vdwg.mxu0
        %v321 = vld [vmem:[%s2 + $0x2] sm:$0x1]
        %v322 = vperm.slane %v321, 0
        %v323 = vmul.f32 %v318, %v322
        %v324 = vadd.f32 %v286, %v323
        %v325 = vld [vmem:[%s223] sm:$0xf]
        %s326 = scalar_lea.vmem %s1, 12
        %v327 = vld [vmem:[%s326] sm:$0xf]
        %329 = vst [vmem:[#allocation1] ss:$4 sm:$0xff] %v325
        %v330 = vld.sshfl [vmem:[#allocation1] sm:$0xff pattern:$0x73625140]
        %v332 = vld.sshfl [vmem:[#allocation1 + $0x8] sm:$0xff pattern:$0x73625140]
        %334 = vrot.lane.b32.xlu0 %v330, 112
        %v335 = vpop.permute.xlu0 %334
        %336 = vrot.lane.b32.xlu0 %v332, 112
        %v337 = vpop.permute.xlu0 %336
        %vm338 = vcmask 916480
        %v339 = vsel %vm338, %v335, %v337
        %v341 = vsel %vm227, %v327, 0
        %v344 = vsel %vm231, %v339, 0
        %346 = vmatpush.bf16.msra.mxu0 0
        %347 = vmatpush.bf16.msra.mxu0 0
        %348 = vmatpush.bf16.msra.mxu0 0
        %349 = vmatpush.bf16.msra.mxu0 0
        %350 = vmatpush.bf16.msra.mxu0 0
        %351 = vmatpush.bf16.msra.mxu0 0
        %352 = vmatpush.bf16.msra.mxu0 0
        %353 = vmatpush.bf16.msra.mxu0 %v344
        %354 = vmatmul.bf16.gmra.mxu0 %v341
        %v355 = vpop.f32.mrf.mxu0
        %v356 = vadd.f32 0.0, %v355
        %v357 = vpop.f32.mrf.mxu0
        %358 = vdwg.mxu0
        %v359 = vmul.f32 %v356, %v249
        %v360 = vadd.f32 %v324, %v359
        %v361 = vld [vmem:[%s223] sm:$0xf]
        %s362 = scalar_lea.vmem %s1, 16
        %v363 = vld [vmem:[%s362] sm:$0xf]
        %365 = vst [vmem:[#allocation1] ss:$4 sm:$0xff] %v361
        %v366 = vld.sshfl [vmem:[#allocation1] sm:$0xff pattern:$0x73625140]
        %v368 = vld.sshfl [vmem:[#allocation1 + $0x8] sm:$0xff pattern:$0x73625140]
        %370 = vrot.lane.b32.xlu0 %v366, 111
        %v371 = vpop.permute.xlu0 %370
        %372 = vrot.lane.b32.xlu0 %v368, 111
        %v373 = vpop.permute.xlu0 %372
        %vm374 = vcmask 908288
        %v375 = vsel %vm374, %v371, %v373
        %v377 = vsel %vm227, %v363, 0
        %v380 = vsel %vm231, %v375, 0
        %382 = vmatpush.bf16.msra.mxu0 0
        %383 = vmatpush.bf16.msra.mxu0 0
        %384 = vmatpush.bf16.msra.mxu0 0
        %385 = vmatpush.bf16.msra.mxu0 0
        %386 = vmatpush.bf16.msra.mxu0 0
        %387 = vmatpush.bf16.msra.mxu0 0
        %388 = vmatpush.bf16.msra.mxu0 0
        %389 = vmatpush.bf16.msra.mxu0 %v380
        %390 = vmatmul.bf16.gmra.mxu0 %v377
        %v391 = vpop.f32.mrf.mxu0
        %v392 = vadd.f32 0.0, %v391
        %v393 = vpop.f32.mrf.mxu0
        %394 = vdwg.mxu0
        %v395 = vadd.f32 %v360, %v392
        %v396 = vld [vmem:[%s223] sm:$0xf]
        %s397 = scalar_lea.vmem %s1, 20
        %v398 = vld [vmem:[%s397] sm:$0xf]
        %400 = vst [vmem:[#allocation1] ss:$4 sm:$0xff] %v396
        %v401 = vld.sshfl [vmem:[#allocation1] sm:$0xff pattern:$0x73625140]
        %v403 = vld.sshfl [vmem:[#allocation1 + $0x8] sm:$0xff pattern:$0x73625140]
        %405 = vrot.lane.b32.xlu0 %v401, 110
        %v406 = vpop.permute.xlu0 %405
        %407 = vrot.lane.b32.xlu0 %v403, 110
        %v408 = vpop.permute.xlu0 %407
        %vm409 = vcmask 900096
        %v410 = vsel %vm409, %v406, %v408
        %v412 = vsel %vm227, %v398, 0
        %v415 = vsel %vm231, %v410, 0
        %417 = vmatpush.bf16.msra.mxu0 0
        %418 = vmatpush.bf16.msra.mxu0 0
        %419 = vmatpush.bf16.msra.mxu0 0
        %420 = vmatpush.bf16.msra.mxu0 0
        %421 = vmatpush.bf16.msra.mxu0 0
        %422 = vmatpush.bf16.msra.mxu0 0
        %423 = vmatpush.bf16.msra.mxu0 0
        %424 = vmatpush.bf16.msra.mxu0 %v415
        %425 = vmatmul.bf16.gmra.mxu0 %v412
        %v426 = vpop.f32.mrf.mxu0
        %v427 = vadd.f32 0.0, %v426
        %v428 = vpop.f32.mrf.mxu0
        %429 = vdwg.mxu0
        %v430 = vmul.f32 %v427, %v322
        %v431 = vadd.f32 %v395, %v430
        %v432 = vld [vmem:[%s223] sm:$0xf]
        %s433 = scalar_lea.vmem %s1, 24
        %v434 = vld [vmem:[%s433] sm:$0xf]
        %436 = vst [vmem:[#allocation1] ss:$4 sm:$0xff] %v432
        %v437 = vld.sshfl [vmem:[#allocation1] sm:$0xff pattern:$0x73625140]
        %v439 = vld.sshfl [vmem:[#allocation1 + $0x8] sm:$0xff pattern:$0x73625140]
        %441 = vrot.lane.b32.xlu0 %v437, 96
        %v442 = vpop.permute.xlu0 %441
        %443 = vrot.lane.b32.xlu0 %v439, 96
        %v444 = vpop.permute.xlu0 %443
        %vm445 = vcmask 785408
        %v446 = vsel %vm445, %v442, %v444
        %v448 = vsel %vm227, %v434, 0
        %v451 = vsel %vm231, %v446, 0
        %453 = vmatpush.bf16.msra.mxu0 0
        %454 = vmatpush.bf16.msra.mxu0 0
        %455 = vmatpush.bf16.msra.mxu0 0
        %456 = vmatpush.bf16.msra.mxu0 0
        %457 = vmatpush.bf16.msra.mxu0 0
        %458 = vmatpush.bf16.msra.mxu0 0
        %459 = vmatpush.bf16.msra.mxu0 0
        %460 = vmatpush.bf16.msra.mxu0 %v451
        %461 = vmatmul.bf16.gmra.mxu0 %v448
        %v462 = vpop.f32.mrf.mxu0
        %v463 = vadd.f32 0.0, %v462
        %v464 = vpop.f32.mrf.mxu0
        %465 = vdwg.mxu0
        %v466 = vmul.f32 %v463, %v249
        %v467 = vadd.f32 %v431, %v466
        %v468 = vld [vmem:[%s223] sm:$0xf]
        %s469 = scalar_lea.vmem %s1, 28
        %v470 = vld [vmem:[%s469] sm:$0xf]
        %472 = vst [vmem:[#allocation1] ss:$4 sm:$0xff] %v468
        %v473 = vld.sshfl [vmem:[#allocation1] sm:$0xff pattern:$0x73625140]
        %v475 = vld.sshfl [vmem:[#allocation1 + $0x8] sm:$0xff pattern:$0x73625140]
        %477 = vrot.lane.b32.xlu0 %v473, 95
        %v478 = vpop.permute.xlu0 %477
        %479 = vrot.lane.b32.xlu0 %v475, 95
        %v480 = vpop.permute.xlu0 %479
        %vm481 = vcmask 777216
        %v482 = vsel %vm481, %v478, %v480
        %v484 = vsel %vm227, %v470, 0
        %v487 = vsel %vm231, %v482, 0
        %489 = vmatpush.bf16.msra.mxu0 0
        %490 = vmatpush.bf16.msra.mxu0 0
        %491 = vmatpush.bf16.msra.mxu0 0
        %492 = vmatpush.bf16.msra.mxu0 0
        %493 = vmatpush.bf16.msra.mxu0 0
        %494 = vmatpush.bf16.msra.mxu0 0
        %495 = vmatpush.bf16.msra.mxu0 0
        %496 = vmatpush.bf16.msra.mxu0 %v487
        %497 = vmatmul.bf16.gmra.mxu0 %v484
        %v498 = vpop.f32.mrf.mxu0
        %v499 = vadd.f32 0.0, %v498
        %v500 = vpop.f32.mrf.mxu0
        %501 = vdwg.mxu0
        %v502 = vadd.f32 %v467, %v499
        %v503 = vld [vmem:[%s223] sm:$0xf]
        %s504 = scalar_lea.vmem %s1, 32
        %v505 = vld [vmem:[%s504] sm:$0xf]
        %507 = vst [vmem:[#allocation1] ss:$4 sm:$0xff] %v503
        %v508 = vld.sshfl [vmem:[#allocation1] sm:$0xff pattern:$0x73625140]
        %v510 = vld.sshfl [vmem:[#allocation1 + $0x8] sm:$0xff pattern:$0x73625140]
        %512 = vrot.lane.b32.xlu0 %v508, 94
        %v513 = vpop.permute.xlu0 %512
        %514 = vrot.lane.b32.xlu0 %v510, 94
        %v515 = vpop.permute.xlu0 %514
        %vm516 = vcmask 769024
        %v517 = vsel %vm516, %v513, %v515
        %v519 = vsel %vm227, %v505, 0
        %v522 = vsel %vm231, %v517, 0
        %524 = vmatpush.bf16.msra.mxu0 0
        %525 = vmatpush.bf16.msra.mxu0 0
        %526 = vmatpush.bf16.msra.mxu0 0
        %527 = vmatpush.bf16.msra.mxu0 0
        %528 = vmatpush.bf16.msra.mxu0 0
        %529 = vmatpush.bf16.msra.mxu0 0
        %530 = vmatpush.bf16.msra.mxu0 0
        %531 = vmatpush.bf16.msra.mxu0 %v522
        %532 = vmatmul.bf16.gmra.mxu0 %v519
        %v533 = vpop.f32.mrf.mxu0
        %v534 = vadd.f32 0.0, %v533
        %v535 = vpop.f32.mrf.mxu0
        %536 = vdwg.mxu0
        %v537 = vmul.f32 %v534, %v322
        %v538 = vadd.f32 %v502, %v537
        %v539 = vld [vmem:[%s3] sm:$0xff]
        %541 = vset.pattern.permute.xlu0 0
        %542 = vperm.xlu0 %541, %v539
        %v543 = vpop.permute.xlu0 %542
        %v545 = vadd.f32 %v538, %v543
        %546 = vst [vmem:[%s214] sm:$0xff] %v545
        %s547 = sand.u32 %s131, 1
        %s548 = scalar_lea.sflag [#allocation3], %s547
        %s549 = sand.u32 %s131, 1
        %s550 = smul.addr %s549, 8
        %s551 = scalar_lea.vmem [#allocation2], %s550
        // Predicated region
        $region37: #{tpu_custom_call.1} parent=35 // pred_check
          %p552 = pneg %p141
        $region38: #{tpu_custom_call.1} parent=35 // pred_check_branch
          %554 = sbr.rel (%p552) target = $region40
        $region39: #{tpu_custom_call.1} parent=35 // pred_region
          %556 = vsyncadd %s548, 0
          %s557 = smul.addr %s22, 2
          %s558 = sadd.s32 %s23, %s557
          %s559 = smul.addr %s558, 8
          %s560 = scalar_lea.hbm %s4, %s559
          %s562 = sshll.u32 %s551, 4
          %s563 = int_to_ptr.vmem [resolvable:$true] %s562
          %s564 = sshll.u32 %s560, 4
          %s565 = int_to_ptr.hbm [resolvable:$true] %s564
          %567 = dma.vmem_to_hbm [thread:$0]  %s563, 128, %s565, %s548
        $region40: #{tpu_custom_call.1} parent=35 // pred_fallthru
          _
      $region36: #{tpu_custom_call.1} parent=5 // pred_fallthru
        _
      %p568 = scmp.le.s32.totalorder 2, %s13
      // Predicated region
      $region41: #{tpu_custom_call.1} parent=5 // pred_check
        %p569 = pneg %p568
      $region42: #{tpu_custom_call.1} parent=5 // pred_check_branch
        %571 = sbr.rel (%p569) target = $region44
      $region43: #{tpu_custom_call.1} parent=5 // pred_region
        %s572 = ssub.s32 %s13, 2
        // Predicated region
        $region45: #{tpu_custom_call.1} parent=43 // pred_check
          %p573 = pneg %p147
        $region46: #{tpu_custom_call.1} parent=43 // pred_check_branch
          %575 = sbr.rel (%p573) target = $region48
        $region47: #{tpu_custom_call.1} parent=43 // pred_region
          %s576 = sand.u32 %s132, 1
          %s577 = scalar_lea.sflag [#allocation3], %s576
          %s578 = sand.u32 %s132, 1
          %s579 = smul.addr %s578, 8
          %s580 = scalar_lea.vmem [#allocation2], %s579
          %582 = dma.done %s577, 128
        $region48: #{tpu_custom_call.1} parent=43 // pred_fallthru
          _
      $region44: #{tpu_custom_call.1} parent=5 // pred_fallthru
        _
    $region6: #{tpu_custom_call.1} parent=1 // loop_footer
      %s17 = sadd.s32 1, %s13
    $region7: #{tpu_custom_call.1} parent=1 // loop_footer_branch
      %12 = sbr.rel target = $region3
    $region8: #{tpu_custom_call.1} parent=1 // loop_exit
      _
    %583 = vsyncpa [#allocation3], 1
    %s584 = scalar_lea.sflag [#allocation3], 1
    %585 = vsyncpa %s584, 1

</llo_original>
